<compile_context>
chip_gen: v7x
topology: tpu7x:2x2x1
jax: 0.10.0
libtpu: 0.0.40
codegen_flags: <defaults>
</compile_context>

<pallas_src>
import functools

import jax
import jax.numpy as jnp
from jax.experimental import pallas as pl
from jax.experimental.pallas import tpu as pltpu

_VMEM_LIMIT_BYTES = 32 * 1024 * 1024  # portable across v5e/v6e/v7x scoped defaults


# ----------------------------------------------------------------------------
# Helpers
# ----------------------------------------------------------------------------
def _round_up(x, m):
    return (x + m - 1) // m * m


def _pick_tile(n, max_tile, mult=16):
    """Row tile: multiple of `mult`, aims for >=4 grid steps (>=2 per TensorCore
    on v7x so BlockSpec double-buffering overlaps DMA with compute), capped by
    max_tile.  VMEM is not the constraint at these channel widths."""
    quarter = -(-n // 4)
    return max(mult, min(max_tile, _round_up(quarter, mult)))


# ----------------------------------------------------------------------------
# Pallas kernel: batch-aware brute-force kNN (blocked queries, refs in VMEM)
# ----------------------------------------------------------------------------
def _knn_kernel(qx_ref, qb_ref, rx_ref, rb_ref, idx_ref, dist_ref, *, k):
    q = qx_ref[...]                                     # (tq, 8) f32, cols 3..7 = 0
    qb = qb_ref[...]                                    # (tq, 1) f32 batch idx
    r = rx_ref[...]                                     # (8, Np) f32, rows 3..7 = 0
    rb = rb_ref[...]                                    # (1, Np) f32 batch idx (-1 = pad)
    d2 = (jnp.sum(q * q, axis=1, keepdims=True)
          + jnp.sum(r * r, axis=0, keepdims=True)
          - 2.0 * jnp.dot(q, r, preferred_element_type=jnp.float32))
    d2 = jnp.maximum(d2, 0.0)                           # kill cancellation negatives
    d2 = d2 + jnp.where(qb != rb, 1e9, 0.0)             # cross-batch / pad penalty
    n_pad = d2.shape[1]
    lane = jax.lax.broadcasted_iota(jnp.int32, d2.shape, 1).astype(jnp.float32)
    col = jax.lax.broadcasted_iota(jnp.int32, (d2.shape[0], k), 1)
    idx_out = jnp.zeros((d2.shape[0], k), jnp.int32)
    dist_out = jnp.zeros((d2.shape[0], k), jnp.float32)
    for j in range(k):                                  # static, small k (3 / 8)
        m = jnp.min(d2, axis=1, keepdims=True)                        # (tq, 1)
        sel = jnp.min(jnp.where(d2 <= m, lane, float(n_pad)),
                      axis=1, keepdims=True)                          # (tq, 1) f32
        idx_out = jnp.where(col == j, sel.astype(jnp.int32), idx_out)
        dist_out = jnp.where(col == j, m, dist_out)
        d2 = jnp.where(lane == sel, 1e30, d2)
    idx_ref[...] = idx_out
    dist_ref[...] = dist_out


def knn_indices(query_bxyz, ref_bxyz, k, *, max_tile=256):
    """Batch-aware k-nearest-neighbor indices/sq-distances of refs per query."""
    nq = query_bxyz.shape[0]
    n = ref_bxyz.shape[0]
    tq = _pick_tile(nq, max_tile, mult=8)
    nq_pad = _round_up(nq, tq)
    n_pad = _round_up(n, 128)

    qx = jnp.pad(query_bxyz[:, 1:4], ((0, nq_pad - nq), (0, 5)))      # (nq_pad, 8)
    qb = jnp.pad(query_bxyz[:, 0:1], ((0, nq_pad - nq), (0, 0)))      # (nq_pad, 1)
    rx = jnp.pad(ref_bxyz[:, 1:4].T, ((0, 5), (0, 0)))                # (8, n)
    rx = jnp.pad(rx, ((0, 0), (0, n_pad - n)), constant_values=1e4)   # padded refs far away
    rb = jnp.pad(ref_bxyz[:, 0:1].T, ((0, 0), (0, n_pad - n)),
                 constant_values=-1.0)                                # (1, n_pad)

    idx, d2 = pl.pallas_call(
        functools.partial(_knn_kernel, k=k),
        out_shape=(jax.ShapeDtypeStruct((nq_pad, k), jnp.int32),
                   jax.ShapeDtypeStruct((nq_pad, k), jnp.float32)),
        grid=(nq_pad // tq,),
        in_specs=[
            pl.BlockSpec((tq, 8), lambda i: (i, 0)),
            pl.BlockSpec((tq, 1), lambda i: (i, 0)),
            pl.BlockSpec((8, n_pad), lambda i: (0, 0)),
            pl.BlockSpec((1, n_pad), lambda i: (0, 0)),
        ],
        out_specs=[pl.BlockSpec((tq, k), lambda i: (i, 0)),
                   pl.BlockSpec((tq, k), lambda i: (i, 0))],
        compiler_params=pltpu.CompilerParams(
            dimension_semantics=("parallel",),
            vmem_limit_bytes=_VMEM_LIMIT_BYTES),
    )(qx, qb, rx, rb)
    return idx[:nq], d2[:nq]


# ----------------------------------------------------------------------------
# Pallas kernel: SA shared MLP (2 layers, ReLU) + max-pool over K neighbors
# ----------------------------------------------------------------------------
def _sa_mlp_max_kernel(x_ref, w1_ref, b1_ref, w2_ref, b2_ref, o_ref,
                       *, num_neighbors, rows):
    """x_ref: (K*TQ, Cin) bf16, k-major slabs of TQ query rows each.
    One stacked MXU matmul per layer (f32 accumulation), then an elementwise
    max across the K aligned (TQ, C2) slabs.  o_ref: (TQ, C2_pad) bf16."""
    x = x_ref[...]
    h = jnp.dot(x, w1_ref[...], preferred_element_type=jnp.float32)
    h = jnp.maximum(h + b1_ref[...], 0.0)
    h = jnp.dot(h.astype(w2_ref.dtype), w2_ref[...],
                preferred_element_type=jnp.float32)
    h = jnp.maximum(h + b2_ref[...], 0.0)
    acc = h[0:rows]
    for k in range(1, num_neighbors):                 # K-1 elementwise maxes
        acc = jnp.maximum(acc, h[k * rows:(k + 1) * rows])
    o_ref[...] = acc.astype(o_ref.dtype)


def sa_group_mlp_max(point_bxyz, point_feat, new_bxyz, group_ids,
                     w1, b1, w2, b2, *, max_tile=1024):
    """Gather neighbors + relative xyz, run the shared MLP, max-pool over K.

    The gather is emitted directly in (tile, k, row) order and bf16, so the
    kernel's input block is a single contiguous (K*TQ, Cin) slab and the
    grouped tensor touches HBM exactly once.
    """
    nq, kk = group_ids.shape
    c_feat = point_feat.shape[1]
    cin = 3 + c_feat
    c1, c2 = w1.shape[1], w2.shape[1]

    cin_pad = _round_up(cin, 16)
    c1_pad = _round_up(c1, 128)
    c2_pad = _round_up(c2, 128)
    tq = _pick_tile(nq, max_tile, mult=16)
    nq_pad = _round_up(nq, tq)
    t = nq_pad // tq

    # TODO(synk): fuse this gather fully into the kernel (scalar-prefetched
    # group_ids + manual DMA row gather from HBM) to remove the last HBM pass.
    ids = jnp.pad(group_ids, ((0, nq_pad - nq), (0, 0)))
    ids = ids.reshape(t, tq, kk).transpose(0, 2, 1)                   # [T, K, tq]
    nbr_xyz = point_bxyz[:, 1:4][ids]                                  # [T, K, tq, 3]
    nbr_feat = point_feat[ids]                                         # [T, K, tq, Cf]
    q_xyz = jnp.pad(new_bxyz[:, 1:4], ((0, nq_pad - nq), (0, 0)))
    q_xyz = q_xyz.reshape(t, 1, tq, 3)
    grouped = jnp.concatenate(
        [(nbr_xyz - q_xyz).astype(jnp.bfloat16), nbr_feat.astype(jnp.bfloat16)],
        axis=-1)                                                       # [T, K, tq, cin]
    grouped = jnp.pad(grouped, ((0, 0), (0, 0), (0, 0), (0, cin_pad - cin)))
    grouped = grouped.reshape(t * kk * tq, cin_pad)                    # contiguous reshape

    w1p = jnp.pad(w1, ((0, cin_pad - cin), (0, c1_pad - c1))).astype(jnp.bfloat16)
    b1p = jnp.pad(b1, ((0, 0), (0, c1_pad - c1)))
    w2p = jnp.pad(w2, ((0, c1_pad - c1), (0, c2_pad - c2))).astype(jnp.bfloat16)
    b2p = jnp.pad(b2, ((0, 0), (0, c2_pad - c2)))

    out = pl.pallas_call(
        functools.partial(_sa_mlp_max_kernel, num_neighbors=kk, rows=tq),
        out_shape=jax.ShapeDtypeStruct((nq_pad, c2_pad), jnp.bfloat16),
        grid=(t,),
        in_specs=[
            pl.BlockSpec((kk * tq, cin_pad), lambda i: (i, 0)),
            pl.BlockSpec((cin_pad, c1_pad), lambda i: (0, 0)),
            pl.BlockSpec((1, c1_pad), lambda i: (0, 0)),
            pl.BlockSpec((c1_pad, c2_pad), lambda i: (0, 0)),
            pl.BlockSpec((1, c2_pad), lambda i: (0, 0)),
        ],
        out_specs=pl.BlockSpec((tq, c2_pad), lambda i: (i, 0)),
        compiler_params=pltpu.CompilerParams(
            dimension_semantics=("parallel",),
            vmem_limit_bytes=_VMEM_LIMIT_BYTES),
    )(grouped, w1p, b1p, w2p, b2p)
    return out[:nq, :c2]


# ----------------------------------------------------------------------------
# Pallas kernel: FP 2-layer MLP on [interpolated ++ skip] (concat fused away)
# ----------------------------------------------------------------------------
def _fp_mlp_kernel(xa_ref, xb_ref, w1a_ref, w1b_ref, b1_ref, w2_ref, b2_ref,
                   o_ref):
    h = jnp.dot(xa_ref[...], w1a_ref[...], preferred_element_type=jnp.float32)
    h = h + jnp.dot(xb_ref[...], w1b_ref[...],
                    preferred_element_type=jnp.float32)
    h = jnp.maximum(h + b1_ref[...], 0.0)
    h = jnp.dot(h.astype(w2_ref.dtype), w2_ref[...],
                preferred_element_type=jnp.float32)
    h = jnp.maximum(h + b2_ref[...], 0.0)
    o_ref[...] = h.astype(o_ref.dtype)


def fp_mlp(interp, skip, w1, b1, w2, b2, *, max_tile=2048):
    """interp: [Nq, Cprev], skip: [Nq, Cskip], w1: [Cprev+Cskip, C1]."""
    nq, cprev = interp.shape
    cskip = skip.shape[1]
    c1, c2 = w1.shape[1], w2.shape[1]

    cprev_pad = _round_up(cprev, 16)
    cskip_pad = _round_up(cskip, 16)
    c1_pad = _round_up(c1, 128)
    c2_pad = _round_up(c2, 128)
    tq = _pick_tile(nq, max_tile, mult=16)
    nq_pad = _round_up(nq, tq)

    xa = jnp.pad(interp.astype(jnp.bfloat16),
                 ((0, nq_pad - nq), (0, cprev_pad - cprev)))
    xb = jnp.pad(skip.astype(jnp.bfloat16),
                 ((0, nq_pad - nq), (0, cskip_pad - cskip)))
    w1a = jnp.pad(w1[:cprev], ((0, cprev_pad - cprev), (0, c1_pad - c1))).astype(jnp.bfloat16)
    w1b = jnp.pad(w1[cprev:], ((0, cskip_pad - cskip), (0, c1_pad - c1))).astype(jnp.bfloat16)
    b1p = jnp.pad(b1, ((0, 0), (0, c1_pad - c1)))
    w2p = jnp.pad(w2, ((0, c1_pad - c1), (0, c2_pad - c2))).astype(jnp.bfloat16)
    b2p = jnp.pad(b2, ((0, 0), (0, c2_pad - c2)))

    out = pl.pallas_call(
        _fp_mlp_kernel,
        out_shape=jax.ShapeDtypeStruct((nq_pad, c2_pad), jnp.bfloat16),
        grid=(nq_pad // tq,),
        in_specs=[
            pl.BlockSpec((tq, cprev_pad), lambda i: (i, 0)),
            pl.BlockSpec((tq, cskip_pad), lambda i: (i, 0)),
            pl.BlockSpec((cprev_pad, c1_pad), lambda i: (0, 0)),
            pl.BlockSpec((cskip_pad, c1_pad), lambda i: (0, 0)),
            pl.BlockSpec((1, c1_pad), lambda i: (0, 0)),
            pl.BlockSpec((c1_pad, c2_pad), lambda i: (0, 0)),
            pl.BlockSpec((1, c2_pad), lambda i: (0, 0)),
        ],
        out_specs=pl.BlockSpec((tq, c2_pad), lambda i: (i, 0)),
        compiler_params=pltpu.CompilerParams(
            dimension_semantics=("parallel",),
            vmem_limit_bytes=_VMEM_LIMIT_BYTES),
    )(xa, xb, w1a, w1b, b1p, w2p, b2p)
    return out[:nq, :c2]


# ----------------------------------------------------------------------------
# Module glue (sampling / grouping / interpolation weights) in plain JAX
# ----------------------------------------------------------------------------
def init_linear(key, cin, cout):
    kw, kb = jax.random.split(key)
    w = jax.random.normal(kw, (cin, cout), jnp.float32) * (1.0 / jnp.sqrt(cin))
    b = jax.random.normal(kb, (1, cout), jnp.float32) * 0.01
    return w, b


class PointGroupNetDownBlock:
    """Sampler (strided subsample) + grouper (kNN) + shared MLP + max-pool."""

    def __init__(self, key, in_channel, mlp_channels, stride=4, num_neighbors=8):
        self.stride = stride
        self.k = num_neighbors
        c_in = in_channel + 3  # relative xyz concatenated to neighbor features
        k1, k2 = jax.random.split(key)
        self.w1, self.b1 = init_linear(k1, c_in, mlp_channels[0])
        self.w2, self.b2 = init_linear(k2, mlp_channels[0], mlp_channels[1])

    def __call__(self, point_bxyz, point_feat):
        new_bxyz = point_bxyz[::self.stride]
        group_ids, _ = knn_indices(new_bxyz, point_bxyz, self.k)
        new_feat = sa_group_mlp_max(point_bxyz, point_feat, new_bxyz, group_ids,
                                    self.w1, self.b1, self.w2, self.b2)
        return new_bxyz, new_feat, group_ids


class PointGroupNetUpBlock:
    """3-NN inverse-distance interpolation + skip 'concat' + MLP."""

    def __init__(self, key, skip_channel, prev_channel, mlp_channels):
        c_in = skip_channel + prev_channel
        self.prev_channel = prev_channel
        k1, k2 = jax.random.split(key)
        self.w1, self.b1 = init_linear(k1, c_in, mlp_channels[0])
        self.w2, self.b2 = init_linear(k2, mlp_channels[0], mlp_channels[1])

    def __call__(self, ref_bxyz, ref_feat, query_bxyz, query_feat):
        idx, d2 = knn_indices(query_bxyz, ref_bxyz, 3)
        w = 1.0 / (d2 + 1e-8)
        w = w / jnp.sum(w, axis=-1, keepdims=True)
        # TODO(synk): fold this small (K=3) gather + weighted sum into fp_mlp.
        interp = jnp.sum(ref_feat[idx].astype(jnp.float32) * w[:, :, None], axis=1)
        # w1 rows [0:Cprev] act on interp, [Cprev:] on the skip features;
        # the concat is fused away inside fp_mlp.
        return fp_mlp(interp, query_feat, self.w1, self.b1, self.w2, self.b2)


class PointGroupNet:
    def __init__(self, runtime_cfg, model_cfg, key):
        input_channels = runtime_cfg.get('num_point_features', None)
        self.input_key = model_cfg.get('INPUT_KEY', None) or runtime_cfg.get('input_key', 'point')
        self.samplers = model_cfg.get('SAMPLERS', None)
        self.groupers = model_cfg.get('GROUPERS', None)
        self.sa_channels = model_cfg.get('SA_CHANNELS', None)
        self.fp_channels = model_cfg.get('FP_CHANNELS', None)
        self.scale = runtime_cfg.get('scale', 1)
        self.output_key = model_cfg.get('OUTPUT_KEY', None)
        # TODO(synk): GRAPHS / FUSIONS configs and build_post_processor have no
        # clean Pallas equivalent for this synthetic setup; omitted (no-op).
        keys = jax.random.split(key, len(self.sa_channels) + len(self.fp_channels))
        ki = 0

        self.down_modules = []
        cur_channel = input_channels
        channel_stack = []
        for i, sa_ch in enumerate(self.sa_channels):
            sa_ch = [int(self.scale * c) for c in sa_ch]
            self.down_modules.append(
                PointGroupNetDownBlock(
                    keys[ki], cur_channel, sa_ch,
                    stride=self.samplers[i]['stride'],
                    num_neighbors=self.groupers[i]['num_neighbors']))
            ki += 1
            channel_stack.append(cur_channel)
            cur_channel = sa_ch[-1]

        self.up_modules = []
        for i, fp_ch in enumerate(self.fp_channels):
            fp_ch = [int(self.scale * c) for c in fp_ch]
            self.up_modules.append(
                PointGroupNetUpBlock(keys[ki], channel_stack.pop(), cur_channel, fp_ch))
            ki += 1
            cur_channel = fp_ch[-1]
        self.num_point_features = cur_channel

    def forward(self, batch_dict):
        point_bxyz = batch_dict[f'{self.input_key}_bxyz']
        point_feat = batch_dict[f'{self.input_key}_feat']
        data_stack = [[point_bxyz, point_feat]]
        for i, down_module in enumerate(self.down_modules):
            key = f'pointgroupnet_down{len(self.sa_channels) - i}_out'
            batch_dict[f'{key}_ref'] = point_bxyz
            point_bxyz, point_feat, group_ids = down_module(point_bxyz, point_feat)
            batch_dict[f'{key}_query'] = point_bxyz
            data_stack.append([point_bxyz, point_feat])
            batch_dict[f'{key}_bxyz'] = point_bxyz
            batch_dict[f'{key}_feat'] = point_feat
            batch_dict[f'{key}_group_id'] = group_ids
        point_bxyz_ref, point_feat_ref = data_stack.pop()
        for i, up_module in enumerate(self.up_modules):
            point_bxyz_query, point_feat_query = data_stack.pop()
            point_feat_query = up_module(point_bxyz_ref, point_feat_ref,
                                         point_bxyz_query, point_feat_query)
            point_bxyz_ref, point_feat_ref = (point_bxyz_query, point_feat_query)
            key = f'pointgroupnet_up{i + 1}_out'
            batch_dict[f'{key}_bxyz'] = point_bxyz_ref
            batch_dict[f'{key}_feat'] = point_feat_ref
        if self.output_key is not None:
            batch_dict[f'{self.output_key}_bxyz'] = point_bxyz_ref
            batch_dict[f'{self.output_key}_feat'] = point_feat_ref
        return batch_dict


if __name__ == "__main__":
    key = jax.random.PRNGKey(0)
    k_xyz, k_feat, k_params = jax.random.split(key, 3)

    batch_size, n_per_batch, num_point_features = 2, 128, 4
    n = batch_size * n_per_batch
    batch_idx = jnp.repeat(jnp.arange(batch_size, dtype=jnp.float32), n_per_batch)
    xyz = jax.random.uniform(k_xyz, (n, 3), jnp.float32, 0.0, 10.0)
    point_bxyz = jnp.concatenate([batch_idx[:, None], xyz], axis=-1)          # [256, 4]
    point_feat = jax.random.normal(k_feat, (n, num_point_features), jnp.float32)  # [256, 4]

    runtime_cfg = dict(num_point_features=num_point_features, scale=1, input_key='point')
    model_cfg = dict(
        SA_CHANNELS=[[16, 32], [32, 64]],
        FP_CHANNELS=[[64, 64], [64, 32]],
        SAMPLERS=[dict(stride=4), dict(stride=4)],
        GROUPERS=[dict(num_neighbors=8), dict(num_neighbors=8)],
        OUTPUT_KEY='pointgroupnet_out',
    )

    net = PointGroupNet(runtime_cfg, model_cfg, key=k_params)
    batch_dict = {'point_bxyz': point_bxyz, 'point_feat': point_feat}
    out = net.forward(batch_dict)

    final_feat = out['pointgroupnet_out_feat']
    jax.block_until_ready(final_feat)
    assert final_feat.shape == (n, net.num_point_features)
    assert bool(jnp.all(jnp.isfinite(final_feat.astype(jnp.float32))))
    print("KERNEL_OK")
</pallas_src>

<mosaic_0001>
module attributes {stable_mosaic.version = 11 : i64} {
  func.func @_knn_kernel(%arg0: i32, %arg1: memref<16x8xf32, #tpu.memory_space<vmem>>, %arg2: memref<16x1xf32, #tpu.memory_space<vmem>>, %arg3: memref<8x256xf32, #tpu.memory_space<vmem>>, %arg4: memref<1x256xf32, #tpu.memory_space<vmem>>, %arg5: memref<16x8xi32, #tpu.memory_space<vmem>>, %arg6: memref<16x8xf32, #tpu.memory_space<vmem>>) attributes {dimension_semantics = [#tpu.dimension_semantics<parallel>], iteration_bounds = array<i64: 4>, scalar_prefetch = 0 : i64, scratch_operands = 0 : i64, tpu.core_type = #tpu.core_type<tc>, window_params = [{transform_indices = @transform_0, window_bounds = array<i64: 16, 8>}, {transform_indices = @transform_1, window_bounds = array<i64: 16, 1>}, {pipeline_mode = #tpu.pipeline_mode<synchronous>, transform_indices = @transform_2, window_bounds = array<i64: 8, 256>}, {pipeline_mode = #tpu.pipeline_mode<synchronous>, transform_indices = @transform_3, window_bounds = array<i64: 1, 256>}, {transform_indices = @transform_4, window_bounds = array<i64: 16, 8>}, {transform_indices = @transform_5, window_bounds = array<i64: 16, 8>}]} {
    %c0 = arith.constant 0 : index
    %c0_0 = arith.constant 0 : index
    %0 = vector.load %arg1[%c0, %c0_0] : memref<16x8xf32, #tpu.memory_space<vmem>>, vector<16x8xf32>
    %c0_1 = arith.constant 0 : index
    %c0_2 = arith.constant 0 : index
    %1 = vector.load %arg2[%c0_1, %c0_2] : memref<16x1xf32, #tpu.memory_space<vmem>>, vector<16x1xf32>
    %c0_3 = arith.constant 0 : index
    %c0_4 = arith.constant 0 : index
    %2 = vector.load %arg3[%c0_3, %c0_4] : memref<8x256xf32, #tpu.memory_space<vmem>>, vector<8x256xf32>
    %c0_5 = arith.constant 0 : index
    %c0_6 = arith.constant 0 : index
    %3 = vector.load %arg4[%c0_5, %c0_6] : memref<1x256xf32, #tpu.memory_space<vmem>>, vector<1x256xf32>
    %4 = arith.mulf %0, %0 : vector<16x8xf32>
    %cst = arith.constant dense<0.000000e+00> : vector<16xf32>
    %5 = vector.multi_reduction <add>, %4, %cst [1] : vector<16x8xf32> to vector<16xf32>
    %6 = vector.shape_cast %5 : vector<16xf32> to vector<16x1xf32>
    %7 = arith.mulf %2, %2 : vector<8x256xf32>
    %cst_7 = arith.constant dense<0.000000e+00> : vector<256xf32>
    %8 = vector.multi_reduction <add>, %7, %cst_7 [0] : vector<8x256xf32> to vector<256xf32>
    %9 = vector.shape_cast %8 : vector<256xf32> to vector<1x256xf32>
    %10 = vector.broadcast %6 : vector<16x1xf32> to vector<16x256xf32>
    %11 = vector.broadcast %9 : vector<1x256xf32> to vector<16x256xf32>
    %12 = arith.addf %10, %11 : vector<16x256xf32>
    %cst_8 = arith.constant dense<0.000000e+00> : vector<16x256xf32>
    %13 = tpu.matmul %0, %2, %cst_8 {dimension_numbers = #tpu.dot_dimension_numbers<[1], [0], [0], [1], [0, 0, 1, 1], [], []>} : vector<16x8xf32>, vector<8x256xf32>, vector<16x256xf32> -> vector<16x256xf32>
    %cst_9 = arith.constant 2.000000e+00 : f32
    %14 = vector.broadcast %cst_9 : f32 to vector<16x256xf32>
    %15 = arith.mulf %14, %13 : vector<16x256xf32>
    %16 = arith.subf %12, %15 : vector<16x256xf32>
    %cst_10 = arith.constant 0.000000e+00 : f32
    %17 = vector.broadcast %cst_10 : f32 to vector<16x256xf32>
    %18 = arith.maximumf %16, %17 : vector<16x256xf32>
    %19 = vector.broadcast %1 : vector<16x1xf32> to vector<16x256xf32>
    %20 = vector.broadcast %3 : vector<1x256xf32> to vector<16x256xf32>
    %21 = arith.cmpf one, %19, %20 : vector<16x256xf32>
    %cst_11 = arith.constant 1.000000e+09 : f32
    %cst_12 = arith.constant 0.000000e+00 : f32
    %22 = vector.broadcast %cst_11 : f32 to vector<16x256xf32>
    %23 = vector.broadcast %cst_12 : f32 to vector<16x256xf32>
    %24 = arith.select %21, %22, %23 : vector<16x256xi1>, vector<16x256xf32>
    %25 = arith.addf %18, %24 : vector<16x256xf32>
    %26 = tpu.iota {dimensions = array<i32: 1>} : vector<16x256xi32>
    %27 = arith.sitofp %26 : vector<16x256xi32> to vector<16x256xf32>
    %28 = tpu.iota {dimensions = array<i32: 1>} : vector<16x8xi32>
    %c0_i32 = arith.constant 0 : i32
    %29 = vector.broadcast %c0_i32 : i32 to vector<16x8xi32>
    %cst_13 = arith.constant 0.000000e+00 : f32
    %30 = vector.broadcast %cst_13 : f32 to vector<16x8xf32>
    %cst_14 = arith.constant dense<0x7F800000> : vector<16xf32>
    %31 = vector.multi_reduction <minimumf>, %25, %cst_14 [1] : vector<16x256xf32> to vector<16xf32>
    %32 = vector.shape_cast %31 : vector<16xf32> to vector<16x1xf32>
    %33 = vector.broadcast %32 : vector<16x1xf32> to vector<16x256xf32>
    %34 = arith.cmpf ole, %25, %33 : vector<16x256xf32>
    %cst_15 = arith.constant 2.560000e+02 : f32
    %35 = vector.broadcast %cst_15 : f32 to vector<16x256xf32>
    %36 = arith.select %34, %27, %35 : vector<16x256xi1>, vector<16x256xf32>
    %cst_16 = arith.constant dense<0x7F800000> : vector<16xf32>
    %37 = vector.multi_reduction <minimumf>, %36, %cst_16 [1] : vector<16x256xf32> to vector<16xf32>
    %38 = vector.shape_cast %37 : vector<16xf32> to vector<16x1xf32>
    %c0_i32_17 = arith.constant 0 : i32
    %39 = vector.broadcast %c0_i32_17 : i32 to vector<16x8xi32>
    %40 = arith.cmpi eq, %28, %39 : vector<16x8xi32>
    %41 = arith.fptosi %38 : vector<16x1xf32> to vector<16x1xi32>
    %42 = vector.shape_cast %41 : vector<16x1xi32> to vector<16x1xi32>
    %43 = vector.broadcast %42 : vector<16x1xi32> to vector<16x8xi32>
    %44 = arith.select %40, %43, %29 : vector<16x8xi1>, vector<16x8xi32>
    %c0_i32_18 = arith.constant 0 : i32
    %45 = vector.broadcast %c0_i32_18 : i32 to vector<16x8xi32>
    %46 = arith.cmpi eq, %28, %45 : vector<16x8xi32>
    %47 = vector.shape_cast %32 : vector<16x1xf32> to vector<16x1xf32>
    %48 = vector.broadcast %47 : vector<16x1xf32> to vector<16x8xf32>
    %49 = arith.select %46, %48, %30 : vector<16x8xi1>, vector<16x8xf32>
    %50 = vector.broadcast %38 : vector<16x1xf32> to vector<16x256xf32>
    %51 = arith.cmpf oeq, %27, %50 : vector<16x256xf32>
    %cst_19 = arith.constant 1.000000e+30 : f32
    %52 = vector.broadcast %cst_19 : f32 to vector<16x256xf32>
    %53 = arith.select %51, %52, %25 : vector<16x256xi1>, vector<16x256xf32>
    %cst_20 = arith.constant dense<0x7F800000> : vector<16xf32>
    %54 = vector.multi_reduction <minimumf>, %53, %cst_20 [1] : vector<16x256xf32> to vector<16xf32>
    %55 = vector.shape_cast %54 : vector<16xf32> to vector<16x1xf32>
    %56 = vector.broadcast %55 : vector<16x1xf32> to vector<16x256xf32>
    %57 = arith.cmpf ole, %53, %56 : vector<16x256xf32>
    %cst_21 = arith.constant 2.560000e+02 : f32
    %58 = vector.broadcast %cst_21 : f32 to vector<16x256xf32>
    %59 = arith.select %57, %27, %58 : vector<16x256xi1>, vector<16x256xf32>
    %cst_22 = arith.constant dense<0x7F800000> : vector<16xf32>
    %60 = vector.multi_reduction <minimumf>, %59, %cst_22 [1] : vector<16x256xf32> to vector<16xf32>
    %61 = vector.shape_cast %60 : vector<16xf32> to vector<16x1xf32>
    %c1_i32 = arith.constant 1 : i32
    %62 = vector.broadcast %c1_i32 : i32 to vector<16x8xi32>
    %63 = arith.cmpi eq, %28, %62 : vector<16x8xi32>
    %64 = arith.fptosi %61 : vector<16x1xf32> to vector<16x1xi32>
    %65 = vector.shape_cast %64 : vector<16x1xi32> to vector<16x1xi32>
    %66 = vector.broadcast %65 : vector<16x1xi32> to vector<16x8xi32>
    %67 = arith.select %63, %66, %44 : vector<16x8xi1>, vector<16x8xi32>
    %c1_i32_23 = arith.constant 1 : i32
    %68 = vector.broadcast %c1_i32_23 : i32 to vector<16x8xi32>
    %69 = arith.cmpi eq, %28, %68 : vector<16x8xi32>
    %70 = vector.shape_cast %55 : vector<16x1xf32> to vector<16x1xf32>
    %71 = vector.broadcast %70 : vector<16x1xf32> to vector<16x8xf32>
    %72 = arith.select %69, %71, %49 : vector<16x8xi1>, vector<16x8xf32>
    %73 = vector.broadcast %61 : vector<16x1xf32> to vector<16x256xf32>
    %74 = arith.cmpf oeq, %27, %73 : vector<16x256xf32>
    %cst_24 = arith.constant 1.000000e+30 : f32
    %75 = vector.broadcast %cst_24 : f32 to vector<16x256xf32>
    %76 = arith.select %74, %75, %53 : vector<16x256xi1>, vector<16x256xf32>
    %cst_25 = arith.constant dense<0x7F800000> : vector<16xf32>
    %77 = vector.multi_reduction <minimumf>, %76, %cst_25 [1] : vector<16x256xf32> to vector<16xf32>
    %78 = vector.shape_cast %77 : vector<16xf32> to vector<16x1xf32>
    %79 = vector.broadcast %78 : vector<16x1xf32> to vector<16x256xf32>
    %80 = arith.cmpf ole, %76, %79 : vector<16x256xf32>
    %cst_26 = arith.constant 2.560000e+02 : f32
    %81 = vector.broadcast %cst_26 : f32 to vector<16x256xf32>
    %82 = arith.select %80, %27, %81 : vector<16x256xi1>, vector<16x256xf32>
    %cst_27 = arith.constant dense<0x7F800000> : vector<16xf32>
    %83 = vector.multi_reduction <minimumf>, %82, %cst_27 [1] : vector<16x256xf32> to vector<16xf32>
    %84 = vector.shape_cast %83 : vector<16xf32> to vector<16x1xf32>
    %c2_i32 = arith.constant 2 : i32
    %85 = vector.broadcast %c2_i32 : i32 to vector<16x8xi32>
    %86 = arith.cmpi eq, %28, %85 : vector<16x8xi32>
    %87 = arith.fptosi %84 : vector<16x1xf32> to vector<16x1xi32>
    %88 = vector.shape_cast %87 : vector<16x1xi32> to vector<16x1xi32>
    %89 = vector.broadcast %88 : vector<16x1xi32> to vector<16x8xi32>
    %90 = arith.select %86, %89, %67 : vector<16x8xi1>, vector<16x8xi32>
    %c2_i32_28 = arith.constant 2 : i32
    %91 = vector.broadcast %c2_i32_28 : i32 to vector<16x8xi32>
    %92 = arith.cmpi eq, %28, %91 : vector<16x8xi32>
    %93 = vector.shape_cast %78 : vector<16x1xf32> to vector<16x1xf32>
    %94 = vector.broadcast %93 : vector<16x1xf32> to vector<16x8xf32>
    %95 = arith.select %92, %94, %72 : vector<16x8xi1>, vector<16x8xf32>
    %96 = vector.broadcast %84 : vector<16x1xf32> to vector<16x256xf32>
    %97 = arith.cmpf oeq, %27, %96 : vector<16x256xf32>
    %cst_29 = arith.constant 1.000000e+30 : f32
    %98 = vector.broadcast %cst_29 : f32 to vector<16x256xf32>
    %99 = arith.select %97, %98, %76 : vector<16x256xi1>, vector<16x256xf32>
    %cst_30 = arith.constant dense<0x7F800000> : vector<16xf32>
    %100 = vector.multi_reduction <minimumf>, %99, %cst_30 [1] : vector<16x256xf32> to vector<16xf32>
    %101 = vector.shape_cast %100 : vector<16xf32> to vector<16x1xf32>
    %102 = vector.broadcast %101 : vector<16x1xf32> to vector<16x256xf32>
    %103 = arith.cmpf ole, %99, %102 : vector<16x256xf32>
    %cst_31 = arith.constant 2.560000e+02 : f32
    %104 = vector.broadcast %cst_31 : f32 to vector<16x256xf32>
    %105 = arith.select %103, %27, %104 : vector<16x256xi1>, vector<16x256xf32>
    %cst_32 = arith.constant dense<0x7F800000> : vector<16xf32>
    %106 = vector.multi_reduction <minimumf>, %105, %cst_32 [1] : vector<16x256xf32> to vector<16xf32>
    %107 = vector.shape_cast %106 : vector<16xf32> to vector<16x1xf32>
    %c3_i32 = arith.constant 3 : i32
    %108 = vector.broadcast %c3_i32 : i32 to vector<16x8xi32>
    %109 = arith.cmpi eq, %28, %108 : vector<16x8xi32>
    %110 = arith.fptosi %107 : vector<16x1xf32> to vector<16x1xi32>
    %111 = vector.shape_cast %110 : vector<16x1xi32> to vector<16x1xi32>
    %112 = vector.broadcast %111 : vector<16x1xi32> to vector<16x8xi32>
    %113 = arith.select %109, %112, %90 : vector<16x8xi1>, vector<16x8xi32>
    %c3_i32_33 = arith.constant 3 : i32
    %114 = vector.broadcast %c3_i32_33 : i32 to vector<16x8xi32>
    %115 = arith.cmpi eq, %28, %114 : vector<16x8xi32>
    %116 = vector.shape_cast %101 : vector<16x1xf32> to vector<16x1xf32>
    %117 = vector.broadcast %116 : vector<16x1xf32> to vector<16x8xf32>
    %118 = arith.select %115, %117, %95 : vector<16x8xi1>, vector<16x8xf32>
    %119 = vector.broadcast %107 : vector<16x1xf32> to vector<16x256xf32>
    %120 = arith.cmpf oeq, %27, %119 : vector<16x256xf32>
    %cst_34 = arith.constant 1.000000e+30 : f32
    %121 = vector.broadcast %cst_34 : f32 to vector<16x256xf32>
    %122 = arith.select %120, %121, %99 : vector<16x256xi1>, vector<16x256xf32>
    %cst_35 = arith.constant dense<0x7F800000> : vector<16xf32>
    %123 = vector.multi_reduction <minimumf>, %122, %cst_35 [1] : vector<16x256xf32> to vector<16xf32>
    %124 = vector.shape_cast %123 : vector<16xf32> to vector<16x1xf32>
    %125 = vector.broadcast %124 : vector<16x1xf32> to vector<16x256xf32>
    %126 = arith.cmpf ole, %122, %125 : vector<16x256xf32>
    %cst_36 = arith.constant 2.560000e+02 : f32
    %127 = vector.broadcast %cst_36 : f32 to vector<16x256xf32>
    %128 = arith.select %126, %27, %127 : vector<16x256xi1>, vector<16x256xf32>
    %cst_37 = arith.constant dense<0x7F800000> : vector<16xf32>
    %129 = vector.multi_reduction <minimumf>, %128, %cst_37 [1] : vector<16x256xf32> to vector<16xf32>
    %130 = vector.shape_cast %129 : vector<16xf32> to vector<16x1xf32>
    %c4_i32 = arith.constant 4 : i32
    %131 = vector.broadcast %c4_i32 : i32 to vector<16x8xi32>
    %132 = arith.cmpi eq, %28, %131 : vector<16x8xi32>
    %133 = arith.fptosi %130 : vector<16x1xf32> to vector<16x1xi32>
    %134 = vector.shape_cast %133 : vector<16x1xi32> to vector<16x1xi32>
    %135 = vector.broadcast %134 : vector<16x1xi32> to vector<16x8xi32>
    %136 = arith.select %132, %135, %113 : vector<16x8xi1>, vector<16x8xi32>
    %c4_i32_38 = arith.constant 4 : i32
    %137 = vector.broadcast %c4_i32_38 : i32 to vector<16x8xi32>
    %138 = arith.cmpi eq, %28, %137 : vector<16x8xi32>
    %139 = vector.shape_cast %124 : vector<16x1xf32> to vector<16x1xf32>
    %140 = vector.broadcast %139 : vector<16x1xf32> to vector<16x8xf32>
    %141 = arith.select %138, %140, %118 : vector<16x8xi1>, vector<16x8xf32>
    %142 = vector.broadcast %130 : vector<16x1xf32> to vector<16x256xf32>
    %143 = arith.cmpf oeq, %27, %142 : vector<16x256xf32>
    %cst_39 = arith.constant 1.000000e+30 : f32
    %144 = vector.broadcast %cst_39 : f32 to vector<16x256xf32>
    %145 = arith.select %143, %144, %122 : vector<16x256xi1>, vector<16x256xf32>
    %cst_40 = arith.constant dense<0x7F800000> : vector<16xf32>
    %146 = vector.multi_reduction <minimumf>, %145, %cst_40 [1] : vector<16x256xf32> to vector<16xf32>
    %147 = vector.shape_cast %146 : vector<16xf32> to vector<16x1xf32>
    %148 = vector.broadcast %147 : vector<16x1xf32> to vector<16x256xf32>
    %149 = arith.cmpf ole, %145, %148 : vector<16x256xf32>
    %cst_41 = arith.constant 2.560000e+02 : f32
    %150 = vector.broadcast %cst_41 : f32 to vector<16x256xf32>
    %151 = arith.select %149, %27, %150 : vector<16x256xi1>, vector<16x256xf32>
    %cst_42 = arith.constant dense<0x7F800000> : vector<16xf32>
    %152 = vector.multi_reduction <minimumf>, %151, %cst_42 [1] : vector<16x256xf32> to vector<16xf32>
    %153 = vector.shape_cast %152 : vector<16xf32> to vector<16x1xf32>
    %c5_i32 = arith.constant 5 : i32
    %154 = vector.broadcast %c5_i32 : i32 to vector<16x8xi32>
    %155 = arith.cmpi eq, %28, %154 : vector<16x8xi32>
    %156 = arith.fptosi %153 : vector<16x1xf32> to vector<16x1xi32>
    %157 = vector.shape_cast %156 : vector<16x1xi32> to vector<16x1xi32>
    %158 = vector.broadcast %157 : vector<16x1xi32> to vector<16x8xi32>
    %159 = arith.select %155, %158, %136 : vector<16x8xi1>, vector<16x8xi32>
    %c5_i32_43 = arith.constant 5 : i32
    %160 = vector.broadcast %c5_i32_43 : i32 to vector<16x8xi32>
    %161 = arith.cmpi eq, %28, %160 : vector<16x8xi32>
    %162 = vector.shape_cast %147 : vector<16x1xf32> to vector<16x1xf32>
    %163 = vector.broadcast %162 : vector<16x1xf32> to vector<16x8xf32>
    %164 = arith.select %161, %163, %141 : vector<16x8xi1>, vector<16x8xf32>
    %165 = vector.broadcast %153 : vector<16x1xf32> to vector<16x256xf32>
    %166 = arith.cmpf oeq, %27, %165 : vector<16x256xf32>
    %cst_44 = arith.constant 1.000000e+30 : f32
    %167 = vector.broadcast %cst_44 : f32 to vector<16x256xf32>
    %168 = arith.select %166, %167, %145 : vector<16x256xi1>, vector<16x256xf32>
    %cst_45 = arith.constant dense<0x7F800000> : vector<16xf32>
    %169 = vector.multi_reduction <minimumf>, %168, %cst_45 [1] : vector<16x256xf32> to vector<16xf32>
    %170 = vector.shape_cast %169 : vector<16xf32> to vector<16x1xf32>
    %171 = vector.broadcast %170 : vector<16x1xf32> to vector<16x256xf32>
    %172 = arith.cmpf ole, %168, %171 : vector<16x256xf32>
    %cst_46 = arith.constant 2.560000e+02 : f32
    %173 = vector.broadcast %cst_46 : f32 to vector<16x256xf32>
    %174 = arith.select %172, %27, %173 : vector<16x256xi1>, vector<16x256xf32>
    %cst_47 = arith.constant dense<0x7F800000> : vector<16xf32>
    %175 = vector.multi_reduction <minimumf>, %174, %cst_47 [1] : vector<16x256xf32> to vector<16xf32>
    %176 = vector.shape_cast %175 : vector<16xf32> to vector<16x1xf32>
    %c6_i32 = arith.constant 6 : i32
    %177 = vector.broadcast %c6_i32 : i32 to vector<16x8xi32>
    %178 = arith.cmpi eq, %28, %177 : vector<16x8xi32>
    %179 = arith.fptosi %176 : vector<16x1xf32> to vector<16x1xi32>
    %180 = vector.shape_cast %179 : vector<16x1xi32> to vector<16x1xi32>
    %181 = vector.broadcast %180 : vector<16x1xi32> to vector<16x8xi32>
    %182 = arith.select %178, %181, %159 : vector<16x8xi1>, vector<16x8xi32>
    %c6_i32_48 = arith.constant 6 : i32
    %183 = vector.broadcast %c6_i32_48 : i32 to vector<16x8xi32>
    %184 = arith.cmpi eq, %28, %183 : vector<16x8xi32>
    %185 = vector.shape_cast %170 : vector<16x1xf32> to vector<16x1xf32>
    %186 = vector.broadcast %185 : vector<16x1xf32> to vector<16x8xf32>
    %187 = arith.select %184, %186, %164 : vector<16x8xi1>, vector<16x8xf32>
    %188 = vector.broadcast %176 : vector<16x1xf32> to vector<16x256xf32>
    %189 = arith.cmpf oeq, %27, %188 : vector<16x256xf32>
    %cst_49 = arith.constant 1.000000e+30 : f32
    %190 = vector.broadcast %cst_49 : f32 to vector<16x256xf32>
    %191 = arith.select %189, %190, %168 : vector<16x256xi1>, vector<16x256xf32>
    %cst_50 = arith.constant dense<0x7F800000> : vector<16xf32>
    %192 = vector.multi_reduction <minimumf>, %191, %cst_50 [1] : vector<16x256xf32> to vector<16xf32>
    %193 = vector.shape_cast %192 : vector<16xf32> to vector<16x1xf32>
    %194 = vector.broadcast %193 : vector<16x1xf32> to vector<16x256xf32>
    %195 = arith.cmpf ole, %191, %194 : vector<16x256xf32>
    %cst_51 = arith.constant 2.560000e+02 : f32
    %196 = vector.broadcast %cst_51 : f32 to vector<16x256xf32>
    %197 = arith.select %195, %27, %196 : vector<16x256xi1>, vector<16x256xf32>
    %cst_52 = arith.constant dense<0x7F800000> : vector<16xf32>
    %198 = vector.multi_reduction <minimumf>, %197, %cst_52 [1] : vector<16x256xf32> to vector<16xf32>
    %199 = vector.shape_cast %198 : vector<16xf32> to vector<16x1xf32>
    %c7_i32 = arith.constant 7 : i32
    %200 = vector.broadcast %c7_i32 : i32 to vector<16x8xi32>
    %201 = arith.cmpi eq, %28, %200 : vector<16x8xi32>
    %202 = arith.fptosi %199 : vector<16x1xf32> to vector<16x1xi32>
    %203 = vector.shape_cast %202 : vector<16x1xi32> to vector<16x1xi32>
    %204 = vector.broadcast %203 : vector<16x1xi32> to vector<16x8xi32>
    %205 = arith.select %201, %204, %182 : vector<16x8xi1>, vector<16x8xi32>
    %c7_i32_53 = arith.constant 7 : i32
    %206 = vector.broadcast %c7_i32_53 : i32 to vector<16x8xi32>
    %207 = arith.cmpi eq, %28, %206 : vector<16x8xi32>
    %208 = vector.shape_cast %193 : vector<16x1xf32> to vector<16x1xf32>
    %209 = vector.broadcast %208 : vector<16x1xf32> to vector<16x8xf32>
    %210 = arith.select %207, %209, %187 : vector<16x8xi1>, vector<16x8xf32>
    %c0_54 = arith.constant 0 : index
    %c0_55 = arith.constant 0 : index
    %211 = vector.load %arg5[%c0_54, %c0_55] : memref<16x8xi32, #tpu.memory_space<vmem>>, vector<16x8xi32>
    tpu.vector_store %arg5[%c0_54, %c0_55], %205 {strides = array<i32>} : memref<16x8xi32, #tpu.memory_space<vmem>>, vector<16x8xi32>,
    %c0_56 = arith.constant 0 : index
    %c0_57 = arith.constant 0 : index
    %212 = vector.load %arg6[%c0_56, %c0_57] : memref<16x8xf32, #tpu.memory_space<vmem>>, vector<16x8xf32>
    tpu.vector_store %arg6[%c0_56, %c0_57], %210 {strides = array<i32>} : memref<16x8xf32, #tpu.memory_space<vmem>>, vector<16x8xf32>,
    return
  }
  func.func @transform_0(%arg0: i32) -> (i32, i32) {
    %c0_i32 = arith.constant 0 : i32
    %c0_i32_0 = arith.constant 0 : i32
    return %arg0, %c0_i32 : i32, i32
  }
  func.func @transform_1(%arg0: i32) -> (i32, i32) {
    %c0_i32 = arith.constant 0 : i32
    %c0_i32_0 = arith.constant 0 : i32
    return %arg0, %c0_i32 : i32, i32
  }
  func.func @transform_2(%arg0: i32) -> (i32, i32) {
    %c0_i32 = arith.constant 0 : i32
    %c0_i32_0 = arith.constant 0 : i32
    %c0_i32_1 = arith.constant 0 : i32
    return %c0_i32, %c0_i32_0 : i32, i32
  }
  func.func @transform_3(%arg0: i32) -> (i32, i32) {
    %c0_i32 = arith.constant 0 : i32
    %c0_i32_0 = arith.constant 0 : i32
    %c0_i32_1 = arith.constant 0 : i32
    return %c0_i32, %c0_i32_0 : i32, i32
  }
  func.func @transform_4(%arg0: i32) -> (i32, i32) {
    %c0_i32 = arith.constant 0 : i32
    %c0_i32_0 = arith.constant 0 : i32
    return %arg0, %c0_i32 : i32, i32
  }
  func.func @transform_5(%arg0: i32) -> (i32, i32) {
    %c0_i32 = arith.constant 0 : i32
    %c0_i32_0 = arith.constant 0 : i32
    return %arg0, %c0_i32 : i32, i32
  }
}

</mosaic_0001>

<llo_original>
// kernel: tpu_custom_call.1
$region0: #{tpu_custom_call.1}
  #allocation0 [shape = 'u32[]', space=smem, size = 0x4, offset = 0x4, fixed_abs, tag = 'smem constant byte address 0x4 - core index']
  #allocation1 [shape = 'u32[144,128]{1,0:T(1,128)}', space=vmem, size = 0x12000, scoped, tag = 'internal scratch']
  %s0 = inlined_call_operand.vmem [shape: f32[64,8], index: 0, kind: input, shape index: {}]
  %s1 = inlined_call_operand.vmem [shape: f32[64,1], index: 1, kind: input, shape index: {}]
  %s2 = inlined_call_operand.vmem [shape: f32[8,256], index: 2, kind: input, shape index: {}]
  %s3 = inlined_call_operand.vmem [shape: f32[1,256], index: 3, kind: input, shape index: {}]
  %s4 = inlined_call_operand.vmem [shape: s32[64,8], index: 4, kind: output, shape index: {0}]
  %s5 = inlined_call_operand.vmem [shape: f32[64,8], index: 5, kind: output, shape index: {1}]
  %6 = xla_tuple %s4, %s5
  %s7 = sld [smem:[#allocation0]]
  $region57: #{tpu_custom_call.1} parent=0
    _
  %s9 = ssub.s32 1, %s7
  %s10 = scalar_select 0, %s9, %s7
  loop: start=0, step=1, limit=6
  $region2: #{tpu_custom_call.1} parent=0 // loop_pre_header
    _
  $region3: #{tpu_custom_call.1} parent=0 // loop_header
    %s12 = sphi 0, %s16
    %p13 = scmp.ge.s32.totalorder %s12, 6
    %s22 = sphi 0, %s24
    %s25 = sphi 0, %s22
    %s26 = sphi 0, %s25
    %s42 = sphi 0, %s26
    %s48 = sphi 0, %s50
    %s51 = sphi 0, %s48
    %s52 = sphi 0, %s51
    %s68 = sphi 0, %s52
    %s72 = sphi 0, %s72
    %s74 = sphi 0, %s72
    %s75 = sphi 0, %s74
    %s89 = sphi 0, %s75
    %s93 = sphi 0, %s93
    %s95 = sphi 0, %s93
    %s96 = sphi 0, %s95
    %s110 = sphi 0, %s96
    %s116 = sphi 0, %s118
    %s119 = sphi 0, %s116
    %s120 = sphi 0, %s119
    %s136 = sphi 0, %s120
    %s142 = sphi 0, %s144
    %s145 = sphi 0, %s142
    %s146 = sphi 0, %s145
    %s162 = sphi 0, %s146
  $region4: #{tpu_custom_call.1} parent=0 // loop_header_branch
    %15 = sbr.rel (%p13) target = $region8
  $region5: #{tpu_custom_call.1} parent=0 // loop_body
    %s17 = ssub.s32 %s12, 1
    %s18 = ssub.s32 %s12, 2
    %s19 = sadd.s32 %s12, 1
    %s20 = ssub.s32 %s12, %s19
    %p21 = scmp.eq.s32.totalorder %s20, 0
    %s23 = sadd.s32 %s22, 1
    %s24 = scalar_select %p21, %s22, %s23
    %p27 = pneg %p21
    %p28 = scmp.eq.s32.totalorder %s12, 3
    %p29 = por %p27, %p28
    %p30 = scmp.ne.s32.totalorder %s22, %s25
    %p31 = scmp.eq.s32.totalorder %s12, 0
    %p32 = por %p30, %p31
    %p33 = scmp.ne.s32.totalorder %s22, %s25
    %p34 = scmp.eq.s32.totalorder %s17, 3
    %p35 = por %p33, %p34
    %p36 = scmp.ne.s32.totalorder %s25, %s26
    %p37 = scmp.eq.s32.totalorder %s17, 0
    %p38 = por %p36, %p37
    %p39 = scmp.ne.s32.totalorder %s25, %s26
    %p40 = scmp.eq.s32.totalorder %s18, 3
    %p41 = por %p39, %p40
    %p43 = scmp.ne.s32.totalorder %s26, %s42
    %p44 = scmp.eq.s32.totalorder %s18, 0
    %p45 = por %p43, %p44
    %s46 = ssub.s32 %s12, %s19
    %p47 = scmp.eq.s32.totalorder %s46, 0
    %s49 = sadd.s32 %s48, 1
    %s50 = scalar_select %p47, %s48, %s49
    %p53 = pneg %p47
    %p54 = scmp.eq.s32.totalorder %s12, 3
    %p55 = por %p53, %p54
    %p56 = scmp.ne.s32.totalorder %s48, %s51
    %p57 = scmp.eq.s32.totalorder %s12, 0
    %p58 = por %p56, %p57
    %p59 = scmp.ne.s32.totalorder %s48, %s51
    %p60 = scmp.eq.s32.totalorder %s17, 3
    %p61 = por %p59, %p60
    %p62 = scmp.ne.s32.totalorder %s51, %s52
    %p63 = scmp.eq.s32.totalorder %s17, 0
    %p64 = por %p62, %p63
    %p65 = scmp.ne.s32.totalorder %s51, %s52
    %p66 = scmp.eq.s32.totalorder %s18, 3
    %p67 = por %p65, %p66
    %p69 = scmp.ne.s32.totalorder %s52, %s68
    %p70 = scmp.eq.s32.totalorder %s18, 0
    %p71 = por %p69, %p70
    %s73 = sadd.s32 %s72, 1
    %p76 = scmp.eq.s32.totalorder %s12, 3
    %p77 = scmp.ne.s32.totalorder %s72, %s74
    %p78 = scmp.eq.s32.totalorder %s12, 0
    %p79 = por %p77, %p78
    %p80 = scmp.ne.s32.totalorder %s72, %s74
    %p81 = scmp.eq.s32.totalorder %s17, 3
    %p82 = por %p80, %p81
    %p83 = scmp.ne.s32.totalorder %s74, %s75
    %p84 = scmp.eq.s32.totalorder %s17, 0
    %p85 = por %p83, %p84
    %p86 = scmp.ne.s32.totalorder %s74, %s75
    %p87 = scmp.eq.s32.totalorder %s18, 3
    %p88 = por %p86, %p87
    %p90 = scmp.ne.s32.totalorder %s75, %s89
    %p91 = scmp.eq.s32.totalorder %s18, 0
    %p92 = por %p90, %p91
    %s94 = sadd.s32 %s93, 1
    %p97 = scmp.eq.s32.totalorder %s12, 3
    %p98 = scmp.ne.s32.totalorder %s93, %s95
    %p99 = scmp.eq.s32.totalorder %s12, 0
    %p100 = por %p98, %p99
    %p101 = scmp.ne.s32.totalorder %s93, %s95
    %p102 = scmp.eq.s32.totalorder %s17, 3
    %p103 = por %p101, %p102
    %p104 = scmp.ne.s32.totalorder %s95, %s96
    %p105 = scmp.eq.s32.totalorder %s17, 0
    %p106 = por %p104, %p105
    %p107 = scmp.ne.s32.totalorder %s95, %s96
    %p108 = scmp.eq.s32.totalorder %s18, 3
    %p109 = por %p107, %p108
    %p111 = scmp.ne.s32.totalorder %s96, %s110
    %p112 = scmp.eq.s32.totalorder %s18, 0
    %p113 = por %p111, %p112
    %s114 = ssub.s32 %s12, %s19
    %p115 = scmp.eq.s32.totalorder %s114, 0
    %s117 = sadd.s32 %s116, 1
    %s118 = scalar_select %p115, %s116, %s117
    %p121 = pneg %p115
    %p122 = scmp.eq.s32.totalorder %s12, 3
    %p123 = por %p121, %p122
    %p124 = scmp.ne.s32.totalorder %s116, %s119
    %p125 = scmp.eq.s32.totalorder %s12, 0
    %p126 = por %p124, %p125
    %p127 = scmp.ne.s32.totalorder %s116, %s119
    %p128 = scmp.eq.s32.totalorder %s17, 3
    %p129 = por %p127, %p128
    %p130 = scmp.ne.s32.totalorder %s119, %s120
    %p131 = scmp.eq.s32.totalorder %s17, 0
    %p132 = por %p130, %p131
    %p133 = scmp.ne.s32.totalorder %s119, %s120
    %p134 = scmp.eq.s32.totalorder %s18, 3
    %p135 = por %p133, %p134
    %p137 = scmp.ne.s32.totalorder %s120, %s136
    %p138 = scmp.eq.s32.totalorder %s18, 0
    %p139 = por %p137, %p138
    %s140 = ssub.s32 %s12, %s19
    %p141 = scmp.eq.s32.totalorder %s140, 0
    %s143 = sadd.s32 %s142, 1
    %s144 = scalar_select %p141, %s142, %s143
    %p147 = pneg %p141
    %p148 = scmp.eq.s32.totalorder %s12, 3
    %p149 = por %p147, %p148
    %p150 = scmp.ne.s32.totalorder %s142, %s145
    %p151 = scmp.eq.s32.totalorder %s12, 0
    %p152 = por %p150, %p151
    %p153 = scmp.ne.s32.totalorder %s142, %s145
    %p154 = scmp.eq.s32.totalorder %s17, 3
    %p155 = por %p153, %p154
    %p156 = scmp.ne.s32.totalorder %s145, %s146
    %p157 = scmp.eq.s32.totalorder %s17, 0
    %p158 = por %p156, %p157
    %p159 = scmp.ne.s32.totalorder %s145, %s146
    %p160 = scmp.eq.s32.totalorder %s18, 3
    %p161 = por %p159, %p160
    %p163 = scmp.ne.s32.totalorder %s146, %s162
    %p164 = scmp.eq.s32.totalorder %s18, 0
    %p165 = por %p163, %p164
    %p166 = scmp.le.s32.totalorder 1, %s12
    %p167 = scmp.lt.s32.totalorder %s12, 5
    %p168 = pnand %p166, %p167
    %p169 = pneg %p168
    // Predicated region
    $region9: #{tpu_custom_call.1} parent=5 // pred_check
      _
    $region10: #{tpu_custom_call.1} parent=5 // pred_check_branch
      %171 = sbr.rel (%p168) target = $region12
    $region11: #{tpu_custom_call.1} parent=5 // pred_region
      %s172 = ssub.s32 %s12, 1
      // Predicated region
      $region13: #{tpu_custom_call.1} parent=11 // pred_check
        %p173 = pneg %p85
      $region14: #{tpu_custom_call.1} parent=11 // pred_check_branch
        %175 = sbr.rel (%p173) target = $region16
      $region15: #{tpu_custom_call.1} parent=11 // pred_region
        _
      $region16: #{tpu_custom_call.1} parent=11 // pred_fallthru
        _
      // Predicated region
      $region17: #{tpu_custom_call.1} parent=11 // pred_check
        %p176 = pneg %p106
      $region18: #{tpu_custom_call.1} parent=11 // pred_check_branch
        %178 = sbr.rel (%p176) target = $region20
      $region19: #{tpu_custom_call.1} parent=11 // pred_region
        _
      $region20: #{tpu_custom_call.1} parent=11 // pred_fallthru
        _
    $region12: #{tpu_custom_call.1} parent=5 // pred_fallthru
      _
    %p179 = scmp.lt.s32.totalorder %s12, 4
    // Predicated region
    $region21: #{tpu_custom_call.1} parent=5 // pred_check
      %p180 = pneg %p179
    $region22: #{tpu_custom_call.1} parent=5 // pred_check_branch
      %182 = sbr.rel (%p180) target = $region24
    $region23: #{tpu_custom_call.1} parent=5 // pred_region
      // Predicated region
      $region25: #{tpu_custom_call.1} parent=23 // pred_check
        %p183 = pneg %p32
      $region26: #{tpu_custom_call.1} parent=23 // pred_check_branch
        %185 = sbr.rel (%p183) target = $region28
      $region27: #{tpu_custom_call.1} parent=23 // pred_region
        %s186 = smul.u32 2, %s12
        %p187 = scmp.lt.s32.totalorder %s186, 7
        %s188 = scalar_select %p187, %s186, 7
        %s189 = smul.addr %s188, 8
        %s190 = scalar_lea.vmem %s0, %s189
        %s191 = smul.u32 2, %s12
      $region28: #{tpu_custom_call.1} parent=23 // pred_fallthru
        _
      // Predicated region
      $region29: #{tpu_custom_call.1} parent=23 // pred_check
        %p192 = pneg %p58
      $region30: #{tpu_custom_call.1} parent=23 // pred_check_branch
        %194 = sbr.rel (%p192) target = $region32
      $region31: #{tpu_custom_call.1} parent=23 // pred_region
        %s195 = smul.u32 2, %s12
        %p196 = scmp.lt.s32.totalorder %s195, 7
        %s197 = scalar_select %p196, %s195, 7
        %s198 = smul.addr %s197, 8
        %s199 = scalar_lea.vmem %s1, %s198
        %s200 = smul.u32 2, %s12
      $region32: #{tpu_custom_call.1} parent=23 // pred_fallthru
        _
    $region24: #{tpu_custom_call.1} parent=5 // pred_fallthru
      _
    %p201 = scmp.le.s32.totalorder 1, %s12
    %p202 = scmp.lt.s32.totalorder %s12, 5
    %p203 = pnand %p201, %p202
    %p204 = pneg %p203
    // Predicated region
    $region33: #{tpu_custom_call.1} parent=5 // pred_check
      _
    $region34: #{tpu_custom_call.1} parent=5 // pred_check_branch
      %206 = sbr.rel (%p203) target = $region36
    $region35: #{tpu_custom_call.1} parent=5 // pred_region
      %s207 = ssub.s32 %s12, 1
      %s208 = smul.u32 2, %s17
      %p209 = scmp.lt.s32.totalorder %s208, 7
      %s210 = scalar_select %p209, %s208, 7
      %s211 = smul.addr %s210, 8
      %s212 = scalar_lea.vmem %s0, %s211
      %p213 = pneg %p38
      %p214 = pneg %p35
      %s215 = smul.u32 2, %s17
      %p216 = scmp.lt.s32.totalorder %s215, 7
      %s217 = scalar_select %p216, %s215, 7
      %s218 = smul.addr %s217, 8
      %s219 = scalar_lea.vmem %s1, %s218
      %p220 = pneg %p64
      %p221 = pneg %p61
      %p222 = pneg %p85
      %p223 = pneg %p82
      %p224 = pneg %p106
      %p225 = pneg %p103
      %p226 = pneg %p132
      %p227 = pneg %p129
      %s228 = smul.u32 2, %s17
      %p229 = scmp.lt.s32.totalorder %s228, 7
      %s230 = scalar_select %p229, %s228, 7
      %s231 = smul.addr %s230, 8
      %s232 = scalar_lea.vmem %s4, %s231
      %p233 = pneg %p158
      %p234 = pneg %p155
      %s235 = smul.u32 2, %s17
      %p236 = scmp.lt.s32.totalorder %s235, 7
      %s237 = scalar_select %p236, %s235, 7
      %s238 = smul.addr %s237, 8
      %s239 = scalar_lea.vmem %s5, %s238
      %s240 = smul.u32 2, %s17
      %p241 = scmp.lt.s32.totalorder %s240, 7
      %s242 = scalar_select %p241, %s240, 7
      %s243 = smul.addr %s242, 8
      %s244 = scalar_lea.vmem %s0, %s243
      %s245 = smul.u32 2, %s17
      %s246 = smul.u32 2, %s17
      %p247 = scmp.lt.s32.totalorder %s246, 7
      %s248 = scalar_select %p247, %s246, 7
      %s249 = smul.addr %s248, 8
      %s250 = scalar_lea.vmem %s1, %s249
      %s251 = smul.u32 2, %s17
      %s252 = smul.u32 2, %s17
      %p253 = scmp.lt.s32.totalorder %s252, 7
      %s254 = scalar_select %p253, %s252, 7
      %s255 = smul.addr %s254, 8
      %s256 = scalar_lea.vmem %s4, %s255
      %s257 = smul.u32 2, %s17
      %s258 = smul.u32 2, %s17
      %p259 = scmp.lt.s32.totalorder %s258, 7
      %s260 = scalar_select %p259, %s258, 7
      %s261 = smul.addr %s260, 8
      %s262 = scalar_lea.vmem %s5, %s261
      %s263 = smul.u32 2, %s17
      %v264 = vld [vmem:[%s244] sm:$0xff]
      %v265 = vld [vmem:[%s244 + $0x8] sm:$0xff]
      %v266 = vld [vmem:[%s250] sm:$0xff]
      %v267 = vld [vmem:[%s250 + $0x8] sm:$0xff]
      %v268 = vld [vmem:[%s2] sm:$0xff]
      %v269 = vld [vmem:[%s2 + $0x8] sm:$0xff]
      %v270 = vld [vmem:[%s3] sm:$0x3]
      %v271 = vmul.f32 %v264, %v264
      %v272 = vmul.f32 %v265, %v265
      %vm273 = vcmask 64512
      %v274 = vsel %vm273, %v271, 0.0
      %275 = vadd.xlane.f32.xlu0 %v274
      %v276 = vpop.xlane.xlu0 %275
      %v277 = vsel %vm273, %v272, 0.0
      %278 = vadd.xlane.f32.xlu0 %v277
      %v279 = vpop.xlane.xlu0 %278
      %v280 = vmul.f32 %v268, %v268
      %v281 = vmul.f32 %v269, %v269
      %v282 = vrot.slane %v280, 4
      %v283 = vadd.f32 %v280, %v282
      %v284 = vrot.slane %v283, 2
      %v285 = vadd.f32 %v283, %v284
      %v286 = vrot.slane %v285, 1
      %v287 = vadd.f32 %v285, %v286
      %v288 = vrot.slane %v281, 4
      %v289 = vadd.f32 %v281, %v288
      %v290 = vrot.slane %v289, 2
      %v291 = vadd.f32 %v289, %v290
      %v292 = vrot.slane %v291, 1
      %v293 = vadd.f32 %v291, %v292
      %v294 = vadd.f32 %v276, %v287
      %v295 = vadd.f32 %v276, %v293
      %v296 = vadd.f32 %v279, %v287
      %v297 = vadd.f32 %v279, %v293
      %v299 = vsel %vm273, %v264, 0
      %v302 = vsel %vm273, %v265, 0
      %304 = vmatprep.subr.mxu0 %v269
      %305 = vmatpush1.msra.mxu0 %v268
      %306 = vmatprep.subr.mxu0 0.0
      %307 = vmatpush1.msra.mxu0 0.0
      %308 = vmatprep.subr.mxu0 0.0
      %309 = vmatpush1.msra.mxu0 0.0
      %310 = vmatprep.subr.mxu0 0.0
      %311 = vmatpush1.msra.mxu0 0.0
      %312 = vmatprep.subr.mxu0 0.0
      %313 = vmatpush1.msra.mxu0 0.0
      %314 = vmatprep.subr.mxu0 0.0
      %315 = vmatpush1.msra.mxu0 0.0
      %316 = vmatprep.subr.mxu0 0.0
      %317 = vmatpush1.msra.mxu0 0.0
      %318 = vmatprep.subr.mxu0 0.0
      %319 = vmatpush1.msra.mxu0 0.0
      %320 = vmatprep.subr.mxu0 0.0
      %321 = vmatpush1.msra.mxu0 0.0
      %322 = vmatprep.subr.mxu0 0.0
      %323 = vmatpush1.msra.mxu0 0.0
      %324 = vmatprep.subr.mxu0 0.0
      %325 = vmatpush1.msra.mxu0 0.0
      %326 = vmatprep.subr.mxu0 0.0
      %327 = vmatpush1.msra.mxu0 0.0
      %328 = vmatprep.subr.mxu0 0.0
      %329 = vmatpush1.msra.mxu0 0.0
      %330 = vmatprep.subr.mxu0 0.0
      %331 = vmatpush1.msra.mxu0 0.0
      %332 = vmatprep.subr.mxu0 0.0
      %333 = vmatpush1.msra.mxu0 0.0
      %334 = vmatprep.subr.mxu0 0.0
      %335 = vmatpush1.msra.mxu0 0.0
      %336 = vmatprep.subr.mxu0 0.0
      %337 = vmatpush1.msra.mxu0 0.0
      %338 = vmatprep.subr.mxu0 0.0
      %339 = vmatpush1.msra.mxu0 0.0
      %340 = vmatprep.subr.mxu0 0.0
      %341 = vmatpush1.msra.mxu0 0.0
      %342 = vmatprep.subr.mxu0 0.0
      %343 = vmatpush1.msra.mxu0 0.0
      %344 = vmatprep.subr.mxu0 0.0
      %345 = vmatpush1.msra.mxu0 0.0
      %346 = vmatprep.subr.mxu0 0.0
      %347 = vmatpush1.msra.mxu0 0.0
      %348 = vmatprep.subr.mxu0 0.0
      %349 = vmatpush1.msra.mxu0 0.0
      %350 = vmatprep.subr.mxu0 0.0
      %351 = vmatpush1.msra.mxu0 0.0
      %352 = vmatprep.subr.mxu0 0.0
      %353 = vmatpush1.msra.mxu0 0.0
      %354 = vmatprep.subr.mxu0 0.0
      %355 = vmatpush1.msra.mxu0 0.0
      %356 = vmatprep.subr.mxu0 0.0
      %357 = vmatpush1.msra.mxu0 0.0
      %358 = vmatprep.subr.mxu0 0.0
      %359 = vmatpush1.msra.mxu0 0.0
      %360 = vmatprep.subr.mxu0 0.0
      %361 = vmatpush1.msra.mxu0 0.0
      %362 = vmatprep.subr.mxu0 0.0
      %363 = vmatpush1.msra.mxu0 0.0
      %364 = vmatprep.subr.mxu0 0.0
      %365 = vmatpush1.msra.mxu0 0.0
      %366 = vmatprep.subr.mxu0 0.0
      %367 = vmatpush1.msra.mxu0 0.0
      %368 = vmatprep.mubr.f32.mxu0 0.0
      %369 = vmatmul.mubr.f32.gmra.mrb[0].mxu0 %v299
      %v370 = vpop.f32.mrb[0].mxu0
      %v371 = vadd.f32 0.0, %v370
      %v372 = vpop.f32.mrb[0].mxu0
      %v373 = vadd.f32 0.0, %v372
      %374 = vmatprep.mubr.f32.mxu0 0.0
      %375 = vmatmul.mubr.f32.gmra.mrb[0].mxu0 %v302
      %v376 = vpop.f32.mrb[0].mxu0
      %v377 = vadd.f32 0.0, %v376
      %v378 = vpop.f32.mrb[0].mxu0
      %v379 = vadd.f32 0.0, %v378
      %380 = vdwg.mxu0
      %v381 = vmul.f32 %v371, 2.0
      %v382 = vmul.f32 %v373, 2.0
      %v383 = vmul.f32 %v377, 2.0
      %v384 = vmul.f32 %v379, 2.0
      %v385 = vsub.f32 %v294, %v381
      %v386 = vsub.f32 %v295, %v382
      %v387 = vsub.f32 %v296, %v383
      %v388 = vsub.f32 %v297, %v384
      %v389 = vmax.f32 %v385, 0.0
      %v390 = vmax.f32 %v386, 0.0
      %v391 = vmax.f32 %v387, 0.0
      %v392 = vmax.f32 %v388, 0.0
      %394 = vset.pattern.permute.xlu0 0
      %395 = vperm.xlu0 %394, %v266
      %v396 = vpop.permute.xlu0 %395
      %399 = vset.pattern.permute.xlu0 0
      %400 = vperm.xlu0 %399, %v267
      %v401 = vpop.permute.xlu0 %400
      %v404 = vlaneseq
      %v405 = vshrl.u32 %v404, 7
      %v406 = vsub.s32 0, %v405
      %v407 = vrot.slane %v270, %v406
      %v408 = vlaneseq
      %v409 = vshrl.u32 %v408, 7
      %v410 = vsub.s32 1, %v409
      %v411 = vrot.slane %v270, %v410
      %vm414 = vcmp.ne.f32.partialorder %v396, %v407
      %vm415 = vcmp.ne.f32.partialorder %v396, %v411
      %vm416 = vcmp.ne.f32.partialorder %v401, %v407
      %vm417 = vcmp.ne.f32.partialorder %v401, %v411
      %v418 = vsel %vm414, 1e+09, 0.0
      %v419 = vsel %vm415, 1e+09, 0.0
      %v420 = vsel %vm416, 1e+09, 0.0
      %v421 = vsel %vm417, 1e+09, 0.0
      %v422 = vadd.f32 %v389, %v418
      %v423 = vadd.f32 %v390, %v419
      %v424 = vadd.f32 %v391, %v420
      %v425 = vadd.f32 %v392, %v421
      %v426 = vlaneseq
      %v427 = vand.u32 %v426, 127
      %v428 = vadd.s32 %v427, 128
      %v429 = vcvt.s32.f32 %v427
      %v430 = vcvt.s32.f32 %v428
      %v431 = vmin.f32 %v422, %v423
      %432 = vmin.xlane.f32.xlu0 %v431
      %v433 = vpop.xlane.xlu0 %432
      %v434 = vmin.f32 %v424, %v425
      %435 = vmin.xlane.f32.xlu0 %v434
      %v436 = vpop.xlane.xlu0 %435
      %vm437 = vcmp.le.f32.partialorder %v422, %v433
      %vm438 = vcmp.le.f32.partialorder %v423, %v433
      %vm439 = vcmp.le.f32.partialorder %v424, %v436
      %vm440 = vcmp.le.f32.partialorder %v425, %v436
      %v441 = vsel %vm437, %v429, 256.0
      %v442 = vsel %vm438, %v430, 256.0
      %v443 = vsel %vm439, %v429, 256.0
      %v444 = vsel %vm440, %v430, 256.0
      %v445 = vmin.f32 %v441, %v442
      %446 = vmin.xlane.f32.xlu0 %v445
      %v447 = vpop.xlane.xlu0 %446
      %v448 = vmin.f32 %v443, %v444
      %449 = vmin.xlane.f32.xlu0 %v448
      %v450 = vpop.xlane.xlu0 %449
      %vm451 = vcmp.eq.s32.totalorder %v427, 0
      %v452 = vcvt.f32.s32.to.zero.pseudo %v447
      %v453 = vcvt.f32.s32.to.zero.pseudo %v450
      %v454 = vsel %vm451, %v452, 0
      %v455 = vsel %vm451, %v453, 0
      %v456 = vsel %vm451, %v433, 0.0
      %v457 = vsel %vm451, %v436, 0.0
      %vm458 = vcmp.eq.f32.partialorder %v429, %v447
      %vm459 = vcmp.eq.f32.partialorder %v430, %v447
      %vm460 = vcmp.eq.f32.partialorder %v429, %v450
      %vm461 = vcmp.eq.f32.partialorder %v430, %v450
      %v462 = vsel %vm458, 1e+30, %v422
      %v463 = vsel %vm459, 1e+30, %v423
      %v464 = vsel %vm460, 1e+30, %v424
      %v465 = vsel %vm461, 1e+30, %v425
      %v466 = vmin.f32 %v462, %v463
      %467 = vmin.xlane.f32.xlu0 %v466
      %v468 = vpop.xlane.xlu0 %467
      %v469 = vmin.f32 %v464, %v465
      %470 = vmin.xlane.f32.xlu0 %v469
      %v471 = vpop.xlane.xlu0 %470
      %vm472 = vcmp.le.f32.partialorder %v462, %v468
      %vm473 = vcmp.le.f32.partialorder %v463, %v468
      %vm474 = vcmp.le.f32.partialorder %v464, %v471
      %vm475 = vcmp.le.f32.partialorder %v465, %v471
      %v476 = vsel %vm472, %v429, 256.0
      %v477 = vsel %vm473, %v430, 256.0
      %v478 = vsel %vm474, %v429, 256.0
      %v479 = vsel %vm475, %v430, 256.0
      %v480 = vmin.f32 %v476, %v477
      %481 = vmin.xlane.f32.xlu0 %v480
      %v482 = vpop.xlane.xlu0 %481
      %v483 = vmin.f32 %v478, %v479
      %484 = vmin.xlane.f32.xlu0 %v483
      %v485 = vpop.xlane.xlu0 %484
      %vm486 = vcmp.eq.s32.totalorder %v427, 1
      %v487 = vcvt.f32.s32.to.zero.pseudo %v482
      %v488 = vcvt.f32.s32.to.zero.pseudo %v485
      %v489 = vsel %vm486, %v487, %v454
      %v490 = vsel %vm486, %v488, %v455
      %v491 = vsel %vm486, %v468, %v456
      %v492 = vsel %vm486, %v471, %v457
      %vm493 = vcmp.eq.f32.partialorder %v429, %v482
      %vm494 = vcmp.eq.f32.partialorder %v430, %v482
      %vm495 = vcmp.eq.f32.partialorder %v429, %v485
      %vm496 = vcmp.eq.f32.partialorder %v430, %v485
      %v497 = vsel %vm493, 1e+30, %v462
      %v498 = vsel %vm494, 1e+30, %v463
      %v499 = vsel %vm495, 1e+30, %v464
      %v500 = vsel %vm496, 1e+30, %v465
      %v501 = vmin.f32 %v497, %v498
      %502 = vmin.xlane.f32.xlu0 %v501
      %v503 = vpop.xlane.xlu0 %502
      %v504 = vmin.f32 %v499, %v500
      %505 = vmin.xlane.f32.xlu0 %v504
      %v506 = vpop.xlane.xlu0 %505
      %vm507 = vcmp.le.f32.partialorder %v497, %v503
      %vm508 = vcmp.le.f32.partialorder %v498, %v503
      %vm509 = vcmp.le.f32.partialorder %v499, %v506
      %vm510 = vcmp.le.f32.partialorder %v500, %v506
      %v511 = vsel %vm507, %v429, 256.0
      %v512 = vsel %vm508, %v430, 256.0
      %v513 = vsel %vm509, %v429, 256.0
      %v514 = vsel %vm510, %v430, 256.0
      %v515 = vmin.f32 %v511, %v512
      %516 = vmin.xlane.f32.xlu0 %v515
      %v517 = vpop.xlane.xlu0 %516
      %v518 = vmin.f32 %v513, %v514
      %519 = vmin.xlane.f32.xlu0 %v518
      %v520 = vpop.xlane.xlu0 %519
      %vm521 = vcmp.eq.s32.totalorder %v427, 2
      %v522 = vcvt.f32.s32.to.zero.pseudo %v517
      %v523 = vcvt.f32.s32.to.zero.pseudo %v520
      %v524 = vsel %vm521, %v522, %v489
      %v525 = vsel %vm521, %v523, %v490
      %v526 = vsel %vm521, %v503, %v491
      %v527 = vsel %vm521, %v506, %v492
      %vm528 = vcmp.eq.f32.partialorder %v429, %v517
      %vm529 = vcmp.eq.f32.partialorder %v430, %v517
      %vm530 = vcmp.eq.f32.partialorder %v429, %v520
      %vm531 = vcmp.eq.f32.partialorder %v430, %v520
      %v532 = vsel %vm528, 1e+30, %v497
      %v533 = vsel %vm529, 1e+30, %v498
      %v534 = vsel %vm530, 1e+30, %v499
      %v535 = vsel %vm531, 1e+30, %v500
      %v536 = vmin.f32 %v532, %v533
      %537 = vmin.xlane.f32.xlu0 %v536
      %v538 = vpop.xlane.xlu0 %537
      %v539 = vmin.f32 %v534, %v535
      %540 = vmin.xlane.f32.xlu0 %v539
      %v541 = vpop.xlane.xlu0 %540
      %vm542 = vcmp.le.f32.partialorder %v532, %v538
      %vm543 = vcmp.le.f32.partialorder %v533, %v538
      %vm544 = vcmp.le.f32.partialorder %v534, %v541
      %vm545 = vcmp.le.f32.partialorder %v535, %v541
      %v546 = vsel %vm542, %v429, 256.0
      %v547 = vsel %vm543, %v430, 256.0
      %v548 = vsel %vm544, %v429, 256.0
      %v549 = vsel %vm545, %v430, 256.0
      %v550 = vmin.f32 %v546, %v547
      %551 = vmin.xlane.f32.xlu0 %v550
      %v552 = vpop.xlane.xlu0 %551
      %v553 = vmin.f32 %v548, %v549
      %554 = vmin.xlane.f32.xlu0 %v553
      %v555 = vpop.xlane.xlu0 %554
      %vm556 = vcmp.eq.s32.totalorder %v427, 3
      %v557 = vcvt.f32.s32.to.zero.pseudo %v552
      %v558 = vcvt.f32.s32.to.zero.pseudo %v555
      %v559 = vsel %vm556, %v557, %v524
      %v560 = vsel %vm556, %v558, %v525
      %v561 = vsel %vm556, %v538, %v526
      %v562 = vsel %vm556, %v541, %v527
      %vm563 = vcmp.eq.f32.partialorder %v429, %v552
      %vm564 = vcmp.eq.f32.partialorder %v430, %v552
      %vm565 = vcmp.eq.f32.partialorder %v429, %v555
      %vm566 = vcmp.eq.f32.partialorder %v430, %v555
      %v567 = vsel %vm563, 1e+30, %v532
      %v568 = vsel %vm564, 1e+30, %v533
      %v569 = vsel %vm565, 1e+30, %v534
      %v570 = vsel %vm566, 1e+30, %v535
      %v571 = vmin.f32 %v567, %v568
      %572 = vmin.xlane.f32.xlu0 %v571
      %v573 = vpop.xlane.xlu0 %572
      %v574 = vmin.f32 %v569, %v570
      %575 = vmin.xlane.f32.xlu0 %v574
      %v576 = vpop.xlane.xlu0 %575
      %vm577 = vcmp.le.f32.partialorder %v567, %v573
      %vm578 = vcmp.le.f32.partialorder %v568, %v573
      %vm579 = vcmp.le.f32.partialorder %v569, %v576
      %vm580 = vcmp.le.f32.partialorder %v570, %v576
      %v581 = vsel %vm577, %v429, 256.0
      %v582 = vsel %vm578, %v430, 256.0
      %v583 = vsel %vm579, %v429, 256.0
      %v584 = vsel %vm580, %v430, 256.0
      %v585 = vmin.f32 %v581, %v582
      %586 = vmin.xlane.f32.xlu0 %v585
      %v587 = vpop.xlane.xlu0 %586
      %v588 = vmin.f32 %v583, %v584
      %589 = vmin.xlane.f32.xlu0 %v588
      %v590 = vpop.xlane.xlu0 %589
      %vm591 = vcmp.eq.s32.totalorder %v427, 4
      %v592 = vcvt.f32.s32.to.zero.pseudo %v587
      %v593 = vcvt.f32.s32.to.zero.pseudo %v590
      %v594 = vsel %vm591, %v592, %v559
      %v595 = vsel %vm591, %v593, %v560
      %v596 = vsel %vm591, %v573, %v561
      %v597 = vsel %vm591, %v576, %v562
      %vm598 = vcmp.eq.f32.partialorder %v429, %v587
      %vm599 = vcmp.eq.f32.partialorder %v430, %v587
      %vm600 = vcmp.eq.f32.partialorder %v429, %v590
      %vm601 = vcmp.eq.f32.partialorder %v430, %v590
      %v602 = vsel %vm598, 1e+30, %v567
      %v603 = vsel %vm599, 1e+30, %v568
      %v604 = vsel %vm600, 1e+30, %v569
      %v605 = vsel %vm601, 1e+30, %v570
      %v606 = vmin.f32 %v602, %v603
      %607 = vmin.xlane.f32.xlu0 %v606
      %v608 = vpop.xlane.xlu0 %607
      %v609 = vmin.f32 %v604, %v605
      %610 = vmin.xlane.f32.xlu0 %v609
      %v611 = vpop.xlane.xlu0 %610
      %vm612 = vcmp.le.f32.partialorder %v602, %v608
      %vm613 = vcmp.le.f32.partialorder %v603, %v608
      %vm614 = vcmp.le.f32.partialorder %v604, %v611
      %vm615 = vcmp.le.f32.partialorder %v605, %v611
      %v616 = vsel %vm612, %v429, 256.0
      %v617 = vsel %vm613, %v430, 256.0
      %v618 = vsel %vm614, %v429, 256.0
      %v619 = vsel %vm615, %v430, 256.0
      %v620 = vmin.f32 %v616, %v617
      %621 = vmin.xlane.f32.xlu0 %v620
      %v622 = vpop.xlane.xlu0 %621
      %v623 = vmin.f32 %v618, %v619
      %624 = vmin.xlane.f32.xlu0 %v623
      %v625 = vpop.xlane.xlu0 %624
      %vm626 = vcmp.eq.s32.totalorder %v427, 5
      %v627 = vcvt.f32.s32.to.zero.pseudo %v622
      %v628 = vcvt.f32.s32.to.zero.pseudo %v625
      %v629 = vsel %vm626, %v627, %v594
      %v630 = vsel %vm626, %v628, %v595
      %v631 = vsel %vm626, %v608, %v596
      %v632 = vsel %vm626, %v611, %v597
      %vm633 = vcmp.eq.f32.partialorder %v429, %v622
      %vm634 = vcmp.eq.f32.partialorder %v430, %v622
      %vm635 = vcmp.eq.f32.partialorder %v429, %v625
      %vm636 = vcmp.eq.f32.partialorder %v430, %v625
      %v637 = vsel %vm633, 1e+30, %v602
      %v638 = vsel %vm634, 1e+30, %v603
      %v639 = vsel %vm635, 1e+30, %v604
      %v640 = vsel %vm636, 1e+30, %v605
      %v641 = vmin.f32 %v637, %v638
      %642 = vmin.xlane.f32.xlu0 %v641
      %v643 = vpop.xlane.xlu0 %642
      %v644 = vmin.f32 %v639, %v640
      %645 = vmin.xlane.f32.xlu0 %v644
      %v646 = vpop.xlane.xlu0 %645
      %vm647 = vcmp.le.f32.partialorder %v637, %v643
      %vm648 = vcmp.le.f32.partialorder %v638, %v643
      %vm649 = vcmp.le.f32.partialorder %v639, %v646
      %vm650 = vcmp.le.f32.partialorder %v640, %v646
      %v651 = vsel %vm647, %v429, 256.0
      %v652 = vsel %vm648, %v430, 256.0
      %v653 = vsel %vm649, %v429, 256.0
      %v654 = vsel %vm650, %v430, 256.0
      %v655 = vmin.f32 %v651, %v652
      %656 = vmin.xlane.f32.xlu0 %v655
      %v657 = vpop.xlane.xlu0 %656
      %v658 = vmin.f32 %v653, %v654
      %659 = vmin.xlane.f32.xlu0 %v658
      %v660 = vpop.xlane.xlu0 %659
      %vm661 = vcmp.eq.s32.totalorder %v427, 6
      %v662 = vcvt.f32.s32.to.zero.pseudo %v657
      %v663 = vcvt.f32.s32.to.zero.pseudo %v660
      %v664 = vsel %vm661, %v662, %v629
      %v665 = vsel %vm661, %v663, %v630
      %v666 = vsel %vm661, %v643, %v631
      %v667 = vsel %vm661, %v646, %v632
      %vm668 = vcmp.eq.f32.partialorder %v429, %v657
      %vm669 = vcmp.eq.f32.partialorder %v430, %v657
      %vm670 = vcmp.eq.f32.partialorder %v429, %v660
      %vm671 = vcmp.eq.f32.partialorder %v430, %v660
      %v672 = vsel %vm668, 1e+30, %v637
      %v673 = vsel %vm669, 1e+30, %v638
      %v674 = vsel %vm670, 1e+30, %v639
      %v675 = vsel %vm671, 1e+30, %v640
      %v676 = vmin.f32 %v672, %v673
      %677 = vmin.xlane.f32.xlu0 %v676
      %v678 = vpop.xlane.xlu0 %677
      %v679 = vmin.f32 %v674, %v675
      %680 = vmin.xlane.f32.xlu0 %v679
      %v681 = vpop.xlane.xlu0 %680
      %vm682 = vcmp.le.f32.partialorder %v672, %v678
      %vm683 = vcmp.le.f32.partialorder %v673, %v678
      %vm684 = vcmp.le.f32.partialorder %v674, %v681
      %vm685 = vcmp.le.f32.partialorder %v675, %v681
      %v686 = vsel %vm682, %v429, 256.0
      %v687 = vsel %vm683, %v430, 256.0
      %v688 = vsel %vm684, %v429, 256.0
      %v689 = vsel %vm685, %v430, 256.0
      %v690 = vmin.f32 %v686, %v687
      %691 = vmin.xlane.f32.xlu0 %v690
      %v692 = vpop.xlane.xlu0 %691
      %v693 = vmin.f32 %v688, %v689
      %694 = vmin.xlane.f32.xlu0 %v693
      %v695 = vpop.xlane.xlu0 %694
      %vm696 = vcmp.eq.s32.totalorder %v427, 7
      %v697 = vcvt.f32.s32.to.zero.pseudo %v692
      %v698 = vcvt.f32.s32.to.zero.pseudo %v695
      %v699 = vsel %vm696, %v697, %v664
      %v700 = vsel %vm696, %v698, %v665
      %v701 = vsel %vm696, %v678, %v666
      %v702 = vsel %vm696, %v681, %v667
      %703 = vst.msk [vmem:[%s256] sm:$0xff] %vm273, %v699
      %704 = vst.msk [vmem:[%s256 + $0x8] sm:$0xff] %vm273, %v700
      %705 = vst.msk [vmem:[%s262] sm:$0xff] %vm273, %v701
      %706 = vst.msk [vmem:[%s262 + $0x8] sm:$0xff] %vm273, %v702
      %s707 = smul.u32 2, %s17
      %p708 = scmp.lt.s32.totalorder %s707, 7
      %s709 = scalar_select %p708, %s707, 7
      %s710 = smul.addr %s709, 8
      %s711 = scalar_lea.vmem %s4, %s710
      %s712 = smul.u32 2, %s17
      %p713 = scmp.lt.s32.totalorder %s712, 7
      %s714 = scalar_select %p713, %s712, 7
      %s715 = smul.addr %s714, 8
      %s716 = scalar_lea.vmem %s5, %s715
      // Predicated region
      $region37: #{tpu_custom_call.1} parent=35 // pred_check
        %p717 = pneg %p129
      $region38: #{tpu_custom_call.1} parent=35 // pred_check_branch
        %719 = sbr.rel (%p717) target = $region40
      $region39: #{tpu_custom_call.1} parent=35 // pred_region
        %s720 = smul.u32 2, %s17
      $region40: #{tpu_custom_call.1} parent=35 // pred_fallthru
        _
      // Predicated region
      $region41: #{tpu_custom_call.1} parent=35 // pred_check
        %p721 = pneg %p155
      $region42: #{tpu_custom_call.1} parent=35 // pred_check_branch
        %723 = sbr.rel (%p721) target = $region44
      $region43: #{tpu_custom_call.1} parent=35 // pred_region
        %s724 = smul.u32 2, %s17
      $region44: #{tpu_custom_call.1} parent=35 // pred_fallthru
        _
    $region36: #{tpu_custom_call.1} parent=5 // pred_fallthru
      _
    %p725 = scmp.le.s32.totalorder 2, %s12
    // Predicated region
    $region45: #{tpu_custom_call.1} parent=5 // pred_check
      %p726 = pneg %p725
    $region46: #{tpu_custom_call.1} parent=5 // pred_check_branch
      %728 = sbr.rel (%p726) target = $region48
    $region47: #{tpu_custom_call.1} parent=5 // pred_region
      %s729 = ssub.s32 %s12, 2
      // Predicated region
      $region49: #{tpu_custom_call.1} parent=47 // pred_check
        %p730 = pneg %p135
      $region50: #{tpu_custom_call.1} parent=47 // pred_check_branch
        %732 = sbr.rel (%p730) target = $region52
      $region51: #{tpu_custom_call.1} parent=47 // pred_region
        %s733 = smul.u32 2, %s18
        %p734 = scmp.lt.s32.totalorder %s733, 7
        %s735 = scalar_select %p734, %s733, 7
        %s736 = smul.addr %s735, 8
        %s737 = scalar_lea.vmem %s4, %s736
      $region52: #{tpu_custom_call.1} parent=47 // pred_fallthru
        _
      // Predicated region
      $region53: #{tpu_custom_call.1} parent=47 // pred_check
        %p738 = pneg %p161
      $region54: #{tpu_custom_call.1} parent=47 // pred_check_branch
        %740 = sbr.rel (%p738) target = $region56
      $region55: #{tpu_custom_call.1} parent=47 // pred_region
        %s741 = smul.u32 2, %s18
        %p742 = scmp.lt.s32.totalorder %s741, 7
        %s743 = scalar_select %p742, %s741, 7
        %s744 = smul.addr %s743, 8
        %s745 = scalar_lea.vmem %s5, %s744
      $region56: #{tpu_custom_call.1} parent=47 // pred_fallthru
        _
    $region48: #{tpu_custom_call.1} parent=5 // pred_fallthru
      _
  $region6: #{tpu_custom_call.1} parent=0 // loop_footer
    %s16 = sadd.s32 1, %s12
  $region7: #{tpu_custom_call.1} parent=0 // loop_footer_branch
    %11 = sbr.rel target = $region3
  $region8: #{tpu_custom_call.1} parent=0 // loop_exit
    _

</llo_original>
